<compile_context>
chip_gen: v5e
topology: v5e:2x2
jax: 0.10.0
libtpu: 0.0.40
codegen_flags: <defaults>
</compile_context>

<pallas_src>
import functools

import jax
import jax.numpy as jnp
from jax.experimental import pallas as pl
from jax.experimental.pallas import tpu as pltpu

IN_DIM = 512
H1_DIM = 72
H2_DIM = 6
OUT_DIM = 2

# Lane-dense padded hidden widths (multiples of 128).
H1_PAD = 128
H2_PAD = 128


def _round_up(x, m):
    return ((x + m - 1) // m) * m


def _fc_kernel(x_ref, w1_ref, b1_ref, w2_ref, b2_ref, w3_ref, b3_ref, o_ref):
    # Fused 3-layer MLP on one (TB, 512) batch tile; weights stay VMEM-resident
    # across grid iterations (constant index maps).
    x = x_ref[...]  # bf16

    # Layer 1: (TB,512) bf16 @ (512,128) bf16 -> f32, + bias, ReLU.
    h1 = jnp.dot(x, w1_ref[...], preferred_element_type=jnp.float32) + b1_ref[...]
    h1 = jnp.maximum(h1, 0.0)

    # Layer 2: (TB,128) @ (128,128) f32 (tiny), + bias, ReLU.
    h2 = jnp.dot(h1, w2_ref[...], preferred_element_type=jnp.float32) + b2_ref[...]
    h2 = jnp.maximum(h2, 0.0)

    # Layer 3: (TB,128) @ (128,2), + bias. (No ReLU, matching the reference.)
    out = jnp.dot(h2, w3_ref[...], preferred_element_type=jnp.float32) + b3_ref[...]
    o_ref[...] = out.astype(o_ref.dtype)


def prepare_params(params):
    """Zero-pad hidden dims to lane-dense widths; cast the big weight to bf16."""
    w1 = jnp.pad(params["w1"], ((0, 0), (0, H1_PAD - H1_DIM))).astype(jnp.bfloat16)
    b1 = jnp.pad(params["b1"], ((0, 0), (0, H1_PAD - H1_DIM)))            # f32
    w2 = jnp.pad(params["w2"], ((0, H1_PAD - H1_DIM), (0, H2_PAD - H2_DIM)))
    b2 = jnp.pad(params["b2"], ((0, 0), (0, H2_PAD - H2_DIM)))
    w3 = jnp.pad(params["w3"], ((0, H2_PAD - H2_DIM), (0, 0)))
    b3 = params["b3"]
    return (w1, b1, w2, b2, w3, b3)


@functools.partial(jax.jit, static_argnames=("tb",))
def fc_forward(x, params, tb=512):
    """x: [B, 512] float32.  params: dict of w1,b1,w2,b2,w3,b3 (unpadded, f32)."""
    B = x.shape[0]

    # Batch tile: >=512 rows for realistic batches (amortizes per-step overhead),
    # clamped down (sublane-aligned) for tiny batches.
    TB = min(tb, _round_up(B, 8))
    B_pad = _round_up(B, TB)
    if B_pad != B:
        x = jnp.pad(x, ((0, B_pad - B), (0, 0)))

    # Feed x as bf16: halves HBM read bytes on a mem-bound kernel.
    x = x.astype(jnp.bfloat16)
    w1, b1, w2, b2, w3, b3 = prepare_params(params)

    grid = (pl.cdiv(B_pad, TB),)
    const = lambda shape: pl.BlockSpec(shape, lambda i: (0, 0))

    weight_bytes = (
        IN_DIM * H1_PAD * 2 + H1_PAD * 4
        + H1_PAD * H2_PAD * 4 + H2_PAD * 4
        + H2_PAD * OUT_DIM * 4 + OUT_DIM * 4
    )
    cost = pl.CostEstimate(
        flops=2 * B_pad * (IN_DIM * H1_PAD + H1_PAD * H2_PAD + H2_PAD * OUT_DIM),
        transcendentals=0,
        bytes_accessed=B_pad * IN_DIM * 2 + B_pad * OUT_DIM * 4 + weight_bytes,
    )

    out = pl.pallas_call(
        _fc_kernel,
        out_shape=jax.ShapeDtypeStruct((B_pad, OUT_DIM), jnp.float32),
        grid=grid,
        in_specs=[
            pl.BlockSpec((TB, IN_DIM), lambda i: (i, 0)),   # x: tiled over batch
            const((IN_DIM, H1_PAD)),                        # weights/biases: resident
            const((1, H1_PAD)),
            const((H1_PAD, H2_PAD)),
            const((1, H2_PAD)),
            const((H2_PAD, OUT_DIM)),
            const((1, OUT_DIM)),
        ],
        out_specs=pl.BlockSpec((TB, OUT_DIM), lambda i: (i, 0)),
        compiler_params=pltpu.CompilerParams(
            dimension_semantics=("parallel",),        # shard batch grid across TCs (v7x)
            vmem_limit_bytes=32 * 1024 * 1024,        # safe on v5e/v6e/v7x for TB<=2048
        ),
        cost_estimate=cost,
    )(x, w1, b1, w2, b2, w3, b3)

    return out[:B]


def init_params(key):
    """Deterministic init mimicking nn.Linear's U(-1/sqrt(fan_in), 1/sqrt(fan_in))."""
    ks = jax.random.split(key, 6)

    def linear(kw, kb, fan_in, fan_out):
        bound = 1.0 / jnp.sqrt(fan_in)
        w = jax.random.uniform(kw, (fan_in, fan_out), jnp.float32, -bound, bound)
        b = jax.random.uniform(kb, (1, fan_out), jnp.float32, -bound, bound)
        return w, b

    w1, b1 = linear(ks[0], ks[1], IN_DIM, H1_DIM)
    w2, b2 = linear(ks[2], ks[3], H1_DIM, H2_DIM)
    w3, b3 = linear(ks[4], ks[5], H2_DIM, OUT_DIM)
    return {"w1": w1, "b1": b1, "w2": w2, "b2": b2, "w3": w3, "b3": b3}


def reference_forward_f32(x, p):
    h1 = jnp.maximum(x @ p["w1"] + p["b1"], 0.0)
    h2 = jnp.maximum(h1 @ p["w2"] + p["b2"], 0.0)
    return h2 @ p["w3"] + p["b3"]


def reference_forward_bf16_inputs(x, p):
    # Same rounding as the kernel (x, w1 in bf16; f32 accumulation) for a tight check.
    xb = x.astype(jnp.bfloat16).astype(jnp.float32)
    w1b = p["w1"].astype(jnp.bfloat16).astype(jnp.float32)
    h1 = jnp.maximum(xb @ w1b + p["b1"], 0.0)
    h2 = jnp.maximum(h1 @ p["w2"] + p["b2"], 0.0)
    return h2 @ p["w3"] + p["b3"]


if __name__ == "__main__":
    key = jax.random.PRNGKey(0)
    kp, kx1, kx2 = jax.random.split(key, 3)
    params = init_params(kp)

    # Small batch (single grid step, TB clamped to 8).
    B1 = 8
    x1 = jax.random.normal(kx1, (B1, IN_DIM), jnp.float32)
    out1 = jax.block_until_ready(fc_forward(x1, params))
    assert out1.shape == (B1, OUT_DIM)
    assert jnp.allclose(out1, reference_forward_bf16_inputs(x1, params), atol=1e-3, rtol=1e-3)
    assert jnp.allclose(out1, reference_forward_f32(x1, params), atol=3e-2, rtol=3e-2)

    # Batch that is not a multiple of the tile / sublane, to exercise padding.
    B2 = 300
    x2 = jax.random.normal(kx2, (B2, IN_DIM), jnp.float32)
    out2 = jax.block_until_ready(fc_forward(x2, params))
    assert out2.shape == (B2, OUT_DIM)
    assert jnp.allclose(out2, reference_forward_bf16_inputs(x2, params), atol=1e-3, rtol=1e-3)
    assert jnp.allclose(out2, reference_forward_f32(x2, params), atol=3e-2, rtol=3e-2)

    print("KERNEL_OK")
</pallas_src>

<mosaic_0001>
module attributes {stable_mosaic.version = 11 : i64} {
  func.func @_fc_kernel(%arg0: i32, %arg1: memref<8x512xbf16, #tpu.memory_space<vmem>>, %arg2: memref<512x128xbf16, #tpu.memory_space<vmem>>, %arg3: memref<1x128xf32, #tpu.memory_space<vmem>>, %arg4: memref<128x128xf32, #tpu.memory_space<vmem>>, %arg5: memref<1x128xf32, #tpu.memory_space<vmem>>, %arg6: memref<128x2xf32, #tpu.memory_space<vmem>>, %arg7: memref<1x2xf32, #tpu.memory_space<vmem>>, %arg8: memref<8x2xf32, #tpu.memory_space<vmem>>) attributes {dimension_semantics = [#tpu.dimension_semantics<parallel>], iteration_bounds = array<i64: 1>, scalar_prefetch = 0 : i64, scratch_operands = 0 : i64, tpu.core_type = #tpu.core_type<tc>, window_params = [{transform_indices = @transform_0, window_bounds = array<i64: 8, 512>}, {pipeline_mode = #tpu.pipeline_mode<synchronous>, transform_indices = @transform_1, window_bounds = array<i64: 512, 128>}, {pipeline_mode = #tpu.pipeline_mode<synchronous>, transform_indices = @transform_2, window_bounds = array<i64: 1, 128>}, {pipeline_mode = #tpu.pipeline_mode<synchronous>, transform_indices = @transform_3, window_bounds = array<i64: 128, 128>}, {pipeline_mode = #tpu.pipeline_mode<synchronous>, transform_indices = @transform_4, window_bounds = array<i64: 1, 128>}, {pipeline_mode = #tpu.pipeline_mode<synchronous>, transform_indices = @transform_5, window_bounds = array<i64: 128, 2>}, {pipeline_mode = #tpu.pipeline_mode<synchronous>, transform_indices = @transform_6, window_bounds = array<i64: 1, 2>}, {transform_indices = @transform_7, window_bounds = array<i64: 8, 2>}]} {
    %c0 = arith.constant 0 : index
    %c0_0 = arith.constant 0 : index
    %0 = vector.load %arg1[%c0, %c0_0] : memref<8x512xbf16, #tpu.memory_space<vmem>>, vector<8x512xbf16>
    %c0_1 = arith.constant 0 : index
    %c0_2 = arith.constant 0 : index
    %1 = vector.load %arg2[%c0_1, %c0_2] : memref<512x128xbf16, #tpu.memory_space<vmem>>, vector<512x128xbf16>
    %cst = arith.constant dense<0.000000e+00> : vector<8x128xf32>
    %2 = tpu.matmul %0, %1, %cst {dimension_numbers = #tpu.dot_dimension_numbers<[1], [0], [0], [1], [0, 0, 1, 1], [], []>} : vector<8x512xbf16>, vector<512x128xbf16>, vector<8x128xf32> -> vector<8x128xf32>
    %c0_3 = arith.constant 0 : index
    %c0_4 = arith.constant 0 : index
    %3 = vector.load %arg3[%c0_3, %c0_4] : memref<1x128xf32, #tpu.memory_space<vmem>>, vector<1x128xf32>
    %4 = vector.broadcast %3 : vector<1x128xf32> to vector<8x128xf32>
    %5 = arith.addf %2, %4 : vector<8x128xf32>
    %cst_5 = arith.constant 0.000000e+00 : f32
    %6 = vector.broadcast %cst_5 : f32 to vector<8x128xf32>
    %7 = arith.maximumf %5, %6 : vector<8x128xf32>
    %c0_6 = arith.constant 0 : index
    %c0_7 = arith.constant 0 : index
    %8 = vector.load %arg4[%c0_6, %c0_7] : memref<128x128xf32, #tpu.memory_space<vmem>>, vector<128x128xf32>
    %cst_8 = arith.constant dense<0.000000e+00> : vector<8x128xf32>
    %9 = tpu.matmul %7, %8, %cst_8 {dimension_numbers = #tpu.dot_dimension_numbers<[1], [0], [0], [1], [0, 0, 1, 1], [], []>} : vector<8x128xf32>, vector<128x128xf32>, vector<8x128xf32> -> vector<8x128xf32>
    %c0_9 = arith.constant 0 : index
    %c0_10 = arith.constant 0 : index
    %10 = vector.load %arg5[%c0_9, %c0_10] : memref<1x128xf32, #tpu.memory_space<vmem>>, vector<1x128xf32>
    %11 = vector.broadcast %10 : vector<1x128xf32> to vector<8x128xf32>
    %12 = arith.addf %9, %11 : vector<8x128xf32>
    %cst_11 = arith.constant 0.000000e+00 : f32
    %13 = vector.broadcast %cst_11 : f32 to vector<8x128xf32>
    %14 = arith.maximumf %12, %13 : vector<8x128xf32>
    %c0_12 = arith.constant 0 : index
    %c0_13 = arith.constant 0 : index
    %15 = vector.load %arg6[%c0_12, %c0_13] : memref<128x2xf32, #tpu.memory_space<vmem>>, vector<128x2xf32>
    %cst_14 = arith.constant dense<0.000000e+00> : vector<8x2xf32>
    %16 = tpu.matmul %14, %15, %cst_14 {dimension_numbers = #tpu.dot_dimension_numbers<[1], [0], [0], [1], [0, 0, 1, 1], [], []>} : vector<8x128xf32>, vector<128x2xf32>, vector<8x2xf32> -> vector<8x2xf32>
    %c0_15 = arith.constant 0 : index
    %c0_16 = arith.constant 0 : index
    %17 = vector.load %arg7[%c0_15, %c0_16] : memref<1x2xf32, #tpu.memory_space<vmem>>, vector<1x2xf32>
    %18 = vector.broadcast %17 : vector<1x2xf32> to vector<8x2xf32>
    %19 = arith.addf %16, %18 : vector<8x2xf32>
    %c0_17 = arith.constant 0 : index
    %c0_18 = arith.constant 0 : index
    %20 = vector.load %arg8[%c0_17, %c0_18] : memref<8x2xf32, #tpu.memory_space<vmem>>, vector<8x2xf32>
    tpu.vector_store %arg8[%c0_17, %c0_18], %19 {strides = array<i32>} : memref<8x2xf32, #tpu.memory_space<vmem>>, vector<8x2xf32>,
    return
  }
  func.func @transform_0(%arg0: i32) -> (i32, i32) {
    %c0_i32 = arith.constant 0 : i32
    %c0_i32_0 = arith.constant 0 : i32
    return %arg0, %c0_i32 : i32, i32
  }
  func.func @transform_1(%arg0: i32) -> (i32, i32) {
    %c0_i32 = arith.constant 0 : i32
    %c0_i32_0 = arith.constant 0 : i32
    %c0_i32_1 = arith.constant 0 : i32
    return %c0_i32, %c0_i32_0 : i32, i32
  }
  func.func @transform_2(%arg0: i32) -> (i32, i32) {
    %c0_i32 = arith.constant 0 : i32
    %c0_i32_0 = arith.constant 0 : i32
    %c0_i32_1 = arith.constant 0 : i32
    return %c0_i32, %c0_i32_0 : i32, i32
  }
  func.func @transform_3(%arg0: i32) -> (i32, i32) {
    %c0_i32 = arith.constant 0 : i32
    %c0_i32_0 = arith.constant 0 : i32
    %c0_i32_1 = arith.constant 0 : i32
    return %c0_i32, %c0_i32_0 : i32, i32
  }
  func.func @transform_4(%arg0: i32) -> (i32, i32) {
    %c0_i32 = arith.constant 0 : i32
    %c0_i32_0 = arith.constant 0 : i32
    %c0_i32_1 = arith.constant 0 : i32
    return %c0_i32, %c0_i32_0 : i32, i32
  }
  func.func @transform_5(%arg0: i32) -> (i32, i32) {
    %c0_i32 = arith.constant 0 : i32
    %c0_i32_0 = arith.constant 0 : i32
    %c0_i32_1 = arith.constant 0 : i32
    return %c0_i32, %c0_i32_0 : i32, i32
  }
  func.func @transform_6(%arg0: i32) -> (i32, i32) {
    %c0_i32 = arith.constant 0 : i32
    %c0_i32_0 = arith.constant 0 : i32
    %c0_i32_1 = arith.constant 0 : i32
    return %c0_i32, %c0_i32_0 : i32, i32
  }
  func.func @transform_7(%arg0: i32) -> (i32, i32) {
    %c0_i32 = arith.constant 0 : i32
    %c0_i32_0 = arith.constant 0 : i32
    return %arg0, %c0_i32 : i32, i32
  }
}

</mosaic_0001>

<llo_original>
// kernel: fc_forward.1
$region0: #{fc_forward.1}
  #allocation0 [shape = 'u32[]', space=smem, size = 0x4, offset = 0x4, fixed_abs, tag = 'smem constant byte address 0x4 - core index']
  #allocation1 [shape = 'u32[72,128]{1,0:T(1,128)}', space=vmem, size = 0x9000, scoped, tag = 'internal scratch']
  %s0 = inlined_call_operand.vmem [shape: bf16[8,512], index: 0, kind: input, shape index: {}]
  %s1 = inlined_call_operand.vmem [shape: bf16[512,128], index: 1, kind: input, shape index: {}]
  %s2 = inlined_call_operand.vmem [shape: f32[1,128], index: 2, kind: input, shape index: {}]
  %s3 = inlined_call_operand.vmem [shape: f32[128,128], index: 3, kind: input, shape index: {}]
  %s4 = inlined_call_operand.vmem [shape: f32[1,128], index: 4, kind: input, shape index: {}]
  %s5 = inlined_call_operand.vmem [shape: f32[128,2], index: 5, kind: input, shape index: {}]
  %s6 = inlined_call_operand.vmem [shape: f32[1,2], index: 6, kind: input, shape index: {}]
  %s7 = inlined_call_operand.vmem [shape: f32[8,2], index: 7, kind: output, shape index: {}]
  %s8 = sld [smem:[#allocation0]]
  $region38: #{fc_forward.1} parent=0
    _
  %s10 = ssub.s32 1, %s8
  %s11 = scalar_select 0, %s10, %s8
  // Predicated region
  $region2: #{fc_forward.1} parent=0 // pred_check
    _
  $region3: #{fc_forward.1} parent=0 // pred_check_branch
    %13 = sbr.rel (0) target = $region5
  $region4: #{fc_forward.1} parent=0 // pred_region
    _
  $region5: #{fc_forward.1} parent=0 // pred_fallthru
    _
  // Predicated region
  $region6: #{fc_forward.1} parent=0 // pred_check
    _
  $region7: #{fc_forward.1} parent=0 // pred_check_branch
    %15 = sbr.rel (0) target = $region9
  $region8: #{fc_forward.1} parent=0 // pred_region
    _
  $region9: #{fc_forward.1} parent=0 // pred_fallthru
    _
  // Predicated region
  $region10: #{fc_forward.1} parent=0 // pred_check
    _
  $region11: #{fc_forward.1} parent=0 // pred_check_branch
    %17 = sbr.rel (0) target = $region13
  $region12: #{fc_forward.1} parent=0 // pred_region
    _
  $region13: #{fc_forward.1} parent=0 // pred_fallthru
    _
  // Predicated region
  $region14: #{fc_forward.1} parent=0 // pred_check
    _
  $region15: #{fc_forward.1} parent=0 // pred_check_branch
    %19 = sbr.rel (0) target = $region17
  $region16: #{fc_forward.1} parent=0 // pred_region
    _
  $region17: #{fc_forward.1} parent=0 // pred_fallthru
    _
  // Predicated region
  $region18: #{fc_forward.1} parent=0 // pred_check
    _
  $region19: #{fc_forward.1} parent=0 // pred_check_branch
    %21 = sbr.rel (0) target = $region21
  $region20: #{fc_forward.1} parent=0 // pred_region
    _
  $region21: #{fc_forward.1} parent=0 // pred_fallthru
    _
  // Predicated region
  $region22: #{fc_forward.1} parent=0 // pred_check
    _
  $region23: #{fc_forward.1} parent=0 // pred_check_branch
    %23 = sbr.rel (0) target = $region25
  $region24: #{fc_forward.1} parent=0 // pred_region
    _
  $region25: #{fc_forward.1} parent=0 // pred_fallthru
    _
  // Predicated region
  $region26: #{fc_forward.1} parent=0 // pred_check
    _
  $region27: #{fc_forward.1} parent=0 // pred_check_branch
    %25 = sbr.rel (0) target = $region29
  $region28: #{fc_forward.1} parent=0 // pred_region
    _
  $region29: #{fc_forward.1} parent=0 // pred_fallthru
    _
  %v26 = vld [vmem:[%s0] sm:$0xff]
  %v27 = vld [vmem:[%s0 + $0x8] sm:$0xff]
  %v28 = vld [vmem:[%s1] sm:$0xf]
  %v29 = vld [vmem:[%s1 + $0x4] sm:$0xf]
  %v30 = vld [vmem:[%s1 + $0x8] sm:$0xf]
  %v31 = vld [vmem:[%s1 + $0xc] sm:$0xf]
  %v32 = vld [vmem:[%s1 + $0x10] sm:$0xf]
  %v33 = vld [vmem:[%s1 + $0x14] sm:$0xf]
  %v34 = vld [vmem:[%s1 + $0x18] sm:$0xf]
  %v35 = vld [vmem:[%s1 + $0x1c] sm:$0xf]
  %v36 = vld [vmem:[%s1 + $0x20] sm:$0xf]
  %v37 = vld [vmem:[%s1 + $0x24] sm:$0xf]
  %v38 = vld [vmem:[%s1 + $0x28] sm:$0xf]
  %v39 = vld [vmem:[%s1 + $0x2c] sm:$0xf]
  %v40 = vld [vmem:[%s1 + $0x30] sm:$0xf]
  %v41 = vld [vmem:[%s1 + $0x34] sm:$0xf]
  %v42 = vld [vmem:[%s1 + $0x38] sm:$0xf]
  %v43 = vld [vmem:[%s1 + $0x3c] sm:$0xf]
  %v44 = vld [vmem:[%s1 + $0x40] sm:$0xf]
  %v45 = vld [vmem:[%s1 + $0x44] sm:$0xf]
  %v46 = vld [vmem:[%s1 + $0x48] sm:$0xf]
  %v47 = vld [vmem:[%s1 + $0x4c] sm:$0xf]
  %v48 = vld [vmem:[%s1 + $0x50] sm:$0xf]
  %v49 = vld [vmem:[%s1 + $0x54] sm:$0xf]
  %v50 = vld [vmem:[%s1 + $0x58] sm:$0xf]
  %v51 = vld [vmem:[%s1 + $0x5c] sm:$0xf]
  %v52 = vld [vmem:[%s1 + $0x60] sm:$0xf]
  %v53 = vld [vmem:[%s1 + $0x64] sm:$0xf]
  %v54 = vld [vmem:[%s1 + $0x68] sm:$0xf]
  %v55 = vld [vmem:[%s1 + $0x6c] sm:$0xf]
  %v56 = vld [vmem:[%s1 + $0x70] sm:$0xf]
  %v57 = vld [vmem:[%s1 + $0x74] sm:$0xf]
  %v58 = vld [vmem:[%s1 + $0x78] sm:$0xf]
  %v59 = vld [vmem:[%s1 + $0x7c] sm:$0xf]
  %v60 = vld [vmem:[%s1 + $0x80] sm:$0xf]
  %v61 = vld [vmem:[%s1 + $0x84] sm:$0xf]
  %v62 = vld [vmem:[%s1 + $0x88] sm:$0xf]
  %v63 = vld [vmem:[%s1 + $0x8c] sm:$0xf]
  %v64 = vld [vmem:[%s1 + $0x90] sm:$0xf]
  %v65 = vld [vmem:[%s1 + $0x94] sm:$0xf]
  %v66 = vld [vmem:[%s1 + $0x98] sm:$0xf]
  %v67 = vld [vmem:[%s1 + $0x9c] sm:$0xf]
  %v68 = vld [vmem:[%s1 + $0xa0] sm:$0xf]
  %v69 = vld [vmem:[%s1 + $0xa4] sm:$0xf]
  %v70 = vld [vmem:[%s1 + $0xa8] sm:$0xf]
  %v71 = vld [vmem:[%s1 + $0xac] sm:$0xf]
  %v72 = vld [vmem:[%s1 + $0xb0] sm:$0xf]
  %v73 = vld [vmem:[%s1 + $0xb4] sm:$0xf]
  %v74 = vld [vmem:[%s1 + $0xb8] sm:$0xf]
  %v75 = vld [vmem:[%s1 + $0xbc] sm:$0xf]
  %v76 = vld [vmem:[%s1 + $0xc0] sm:$0xf]
  %v77 = vld [vmem:[%s1 + $0xc4] sm:$0xf]
  %v78 = vld [vmem:[%s1 + $0xc8] sm:$0xf]
  %v79 = vld [vmem:[%s1 + $0xcc] sm:$0xf]
  %v80 = vld [vmem:[%s1 + $0xd0] sm:$0xf]
  %v81 = vld [vmem:[%s1 + $0xd4] sm:$0xf]
  %v82 = vld [vmem:[%s1 + $0xd8] sm:$0xf]
  %v83 = vld [vmem:[%s1 + $0xdc] sm:$0xf]
  %v84 = vld [vmem:[%s1 + $0xe0] sm:$0xf]
  %v85 = vld [vmem:[%s1 + $0xe4] sm:$0xf]
  %v86 = vld [vmem:[%s1 + $0xe8] sm:$0xf]
  %v87 = vld [vmem:[%s1 + $0xec] sm:$0xf]
  %v88 = vld [vmem:[%s1 + $0xf0] sm:$0xf]
  %v89 = vld [vmem:[%s1 + $0xf4] sm:$0xf]
  %v90 = vld [vmem:[%s1 + $0xf8] sm:$0xf]
  %v91 = vld [vmem:[%s1 + $0xfc] sm:$0xf]
  %v92 = vld [vmem:[%s2] sm:$0x1]
  %v94 = vperm.slane %v92, 0
  %v98 = vunpack.c.l.b16 %v26
  %v99 = vunpack.c.h.b16 %v26
  %v100 = vunpack.c.l.b16 %v27
  %v101 = vunpack.c.h.b16 %v27
  %v102 = vpack.c.b16 %v98, %v98
  %v103 = vpack.c.b16 %v99, %v99
  %v104 = vpack.c.b16 %v100, %v100
  %v105 = vpack.c.b16 %v101, %v101
  %v174 = vunpack.c.l.b16 %v28
  %v175 = vunpack.c.l.b16 %v29
  %v176 = vunpack.c.l.b16 %v30
  %v177 = vunpack.c.l.b16 %v31
  %v178 = vunpack.c.l.b16 %v32
  %v179 = vunpack.c.l.b16 %v33
  %v180 = vunpack.c.l.b16 %v34
  %v181 = vunpack.c.l.b16 %v35
  %v182 = vunpack.c.l.b16 %v36
  %v183 = vunpack.c.l.b16 %v37
  %v184 = vunpack.c.l.b16 %v38
  %v185 = vunpack.c.l.b16 %v39
  %v186 = vunpack.c.l.b16 %v40
  %v187 = vunpack.c.l.b16 %v41
  %v188 = vunpack.c.l.b16 %v42
  %v189 = vunpack.c.l.b16 %v43
  %v190 = vunpack.c.l.b16 %v44
  %v191 = vunpack.c.l.b16 %v45
  %v192 = vunpack.c.l.b16 %v46
  %v193 = vunpack.c.l.b16 %v47
  %v194 = vunpack.c.l.b16 %v48
  %v195 = vunpack.c.l.b16 %v49
  %v196 = vunpack.c.l.b16 %v50
  %v197 = vunpack.c.l.b16 %v51
  %v198 = vunpack.c.l.b16 %v52
  %v199 = vunpack.c.l.b16 %v53
  %v200 = vunpack.c.l.b16 %v54
  %v201 = vunpack.c.l.b16 %v55
  %v202 = vunpack.c.l.b16 %v56
  %v203 = vunpack.c.l.b16 %v57
  %v204 = vunpack.c.l.b16 %v58
  %v205 = vunpack.c.l.b16 %v59
  %v206 = vunpack.c.l.b16 %v60
  %v207 = vunpack.c.l.b16 %v61
  %v208 = vunpack.c.l.b16 %v62
  %v209 = vunpack.c.l.b16 %v63
  %v210 = vunpack.c.l.b16 %v64
  %v211 = vunpack.c.l.b16 %v65
  %v212 = vunpack.c.l.b16 %v66
  %v213 = vunpack.c.l.b16 %v67
  %v214 = vunpack.c.l.b16 %v68
  %v215 = vunpack.c.l.b16 %v69
  %v216 = vunpack.c.l.b16 %v70
  %v217 = vunpack.c.l.b16 %v71
  %v218 = vunpack.c.l.b16 %v72
  %v219 = vunpack.c.l.b16 %v73
  %v220 = vunpack.c.l.b16 %v74
  %v221 = vunpack.c.l.b16 %v75
  %v222 = vunpack.c.l.b16 %v76
  %v223 = vunpack.c.l.b16 %v77
  %v224 = vunpack.c.l.b16 %v78
  %v225 = vunpack.c.l.b16 %v79
  %v226 = vunpack.c.l.b16 %v80
  %v227 = vunpack.c.l.b16 %v81
  %v228 = vunpack.c.l.b16 %v82
  %v229 = vunpack.c.l.b16 %v83
  %v230 = vunpack.c.l.b16 %v84
  %v231 = vunpack.c.l.b16 %v85
  %v232 = vunpack.c.l.b16 %v86
  %v233 = vunpack.c.l.b16 %v87
  %v234 = vunpack.c.l.b16 %v88
  %v235 = vunpack.c.l.b16 %v89
  %v236 = vunpack.c.l.b16 %v90
  %v237 = vunpack.c.l.b16 %v91
  %v238 = vpack.c.b16 %v175, %v174
  %v239 = vpack.c.b16 %v177, %v176
  %v240 = vpack.c.b16 %v179, %v178
  %v241 = vpack.c.b16 %v181, %v180
  %v242 = vpack.c.b16 %v183, %v182
  %v243 = vpack.c.b16 %v185, %v184
  %v244 = vpack.c.b16 %v187, %v186
  %v245 = vpack.c.b16 %v189, %v188
  %v246 = vpack.c.b16 %v191, %v190
  %v247 = vpack.c.b16 %v193, %v192
  %v248 = vpack.c.b16 %v195, %v194
  %v249 = vpack.c.b16 %v197, %v196
  %v250 = vpack.c.b16 %v199, %v198
  %v251 = vpack.c.b16 %v201, %v200
  %v252 = vpack.c.b16 %v203, %v202
  %v253 = vpack.c.b16 %v205, %v204
  %v254 = vpack.c.b16 %v207, %v206
  %v255 = vpack.c.b16 %v209, %v208
  %v256 = vpack.c.b16 %v211, %v210
  %v257 = vpack.c.b16 %v213, %v212
  %v258 = vpack.c.b16 %v215, %v214
  %v259 = vpack.c.b16 %v217, %v216
  %v260 = vpack.c.b16 %v219, %v218
  %v261 = vpack.c.b16 %v221, %v220
  %v262 = vpack.c.b16 %v223, %v222
  %v263 = vpack.c.b16 %v225, %v224
  %v264 = vpack.c.b16 %v227, %v226
  %v265 = vpack.c.b16 %v229, %v228
  %v266 = vpack.c.b16 %v231, %v230
  %v267 = vpack.c.b16 %v233, %v232
  %v268 = vpack.c.b16 %v235, %v234
  %v269 = vpack.c.b16 %v237, %v236
  %302 = vmatpush.bf16.msra.mxu0 %v245
  %303 = vmatpush.bf16.msra.mxu0 %v244
  %304 = vmatpush.bf16.msra.mxu0 %v243
  %305 = vmatpush.bf16.msra.mxu0 %v242
  %306 = vmatpush.bf16.msra.mxu0 %v241
  %307 = vmatpush.bf16.msra.mxu0 %v240
  %308 = vmatpush.bf16.msra.mxu0 %v239
  %309 = vmatpush.bf16.msra.mxu0 %v238
  %310 = vmatmul.bf16.gmra.mxu0 %v102
  %v311 = vpop.f32.mrf.mxu0
  %v312 = vadd.f32 %v94, %v311
  %v313 = vpop.f32.mrf.mxu0
  %314 = vdwg.mxu0
  %315 = vmatpush.bf16.msra.mxu0 %v253
  %316 = vmatpush.bf16.msra.mxu0 %v252
  %317 = vmatpush.bf16.msra.mxu0 %v251
  %318 = vmatpush.bf16.msra.mxu0 %v250
  %319 = vmatpush.bf16.msra.mxu0 %v249
  %320 = vmatpush.bf16.msra.mxu0 %v248
  %321 = vmatpush.bf16.msra.mxu0 %v247
  %322 = vmatpush.bf16.msra.mxu0 %v246
  %323 = vmatmul.bf16.gmra.mxu0 %v103
  %v324 = vpop.f32.mrf.mxu0
  %v325 = vadd.f32 %v312, %v324
  %v326 = vpop.f32.mrf.mxu0
  %327 = vdwg.mxu0
  %328 = vmatpush.bf16.msra.mxu0 %v261
  %329 = vmatpush.bf16.msra.mxu0 %v260
  %330 = vmatpush.bf16.msra.mxu0 %v259
  %331 = vmatpush.bf16.msra.mxu0 %v258
  %332 = vmatpush.bf16.msra.mxu0 %v257
  %333 = vmatpush.bf16.msra.mxu0 %v256
  %334 = vmatpush.bf16.msra.mxu0 %v255
  %335 = vmatpush.bf16.msra.mxu0 %v254
  %336 = vmatmul.bf16.gmra.mxu0 %v104
  %v337 = vpop.f32.mrf.mxu0
  %v338 = vadd.f32 %v325, %v337
  %v339 = vpop.f32.mrf.mxu0
  %340 = vdwg.mxu0
  %341 = vmatpush.bf16.msra.mxu0 %v269
  %342 = vmatpush.bf16.msra.mxu0 %v268
  %343 = vmatpush.bf16.msra.mxu0 %v267
  %344 = vmatpush.bf16.msra.mxu0 %v266
  %345 = vmatpush.bf16.msra.mxu0 %v265
  %346 = vmatpush.bf16.msra.mxu0 %v264
  %347 = vmatpush.bf16.msra.mxu0 %v263
  %348 = vmatpush.bf16.msra.mxu0 %v262
  %349 = vmatmul.bf16.gmra.mxu0 %v105
  %v350 = vpop.f32.mrf.mxu0
  %v351 = vadd.f32 %v338, %v350
  %v352 = vpop.f32.mrf.mxu0
  %353 = vdwg.mxu0
  %v354 = vmax.f32 %v351, 0.0
  %v355 = vld [vmem:[%s3] sm:$0xff]
  %v356 = vld [vmem:[%s3 + $0x8] sm:$0xff]
  %v357 = vld [vmem:[%s3 + $0x10] sm:$0xff]
  %v358 = vld [vmem:[%s3 + $0x18] sm:$0xff]
  %v359 = vld [vmem:[%s3 + $0x20] sm:$0xff]
  %v360 = vld [vmem:[%s3 + $0x28] sm:$0xff]
  %v361 = vld [vmem:[%s3 + $0x30] sm:$0xff]
  %v362 = vld [vmem:[%s3 + $0x38] sm:$0xff]
  %v363 = vld [vmem:[%s3 + $0x40] sm:$0xff]
  %v364 = vld [vmem:[%s3 + $0x48] sm:$0xff]
  %v365 = vld [vmem:[%s3 + $0x50] sm:$0xff]
  %v366 = vld [vmem:[%s3 + $0x58] sm:$0xff]
  %v367 = vld [vmem:[%s3 + $0x60] sm:$0xff]
  %v368 = vld [vmem:[%s3 + $0x68] sm:$0xff]
  %v369 = vld [vmem:[%s3 + $0x70] sm:$0xff]
  %v370 = vld [vmem:[%s3 + $0x78] sm:$0xff]
  %v371 = vld [vmem:[%s4] sm:$0x1]
  %v373 = vperm.slane %v371, 0
  %375 = vmatpush.msra.mxu0 %v370
  %376 = vmatpush.msra.mxu0 %v369
  %377 = vmatpush.msra.mxu0 %v368
  %378 = vmatpush.msra.mxu0 %v367
  %379 = vmatpush.msra.mxu0 %v366
  %380 = vmatpush.msra.mxu0 %v365
  %381 = vmatpush.msra.mxu0 %v364
  %382 = vmatpush.msra.mxu0 %v363
  %383 = vmatpush.msra.mxu0 %v362
  %384 = vmatpush.msra.mxu0 %v361
  %385 = vmatpush.msra.mxu0 %v360
  %386 = vmatpush.msra.mxu0 %v359
  %387 = vmatpush.msra.mxu0 %v358
  %388 = vmatpush.msra.mxu0 %v357
  %389 = vmatpush.msra.mxu0 %v356
  %390 = vmatpush.msra.mxu0 %v355
  %391 = vmatmul.f32.gmra.mxu0 %v354
  %v392 = vpop.f32.mrf.mxu0
  %v393 = vadd.f32 %v373, %v392
  %394 = vdwg.mxu0
  %v395 = vmax.f32 %v393, 0.0
  %v396 = vld [vmem:[%s5] sm:$0xff]
  %v397 = vld [vmem:[%s5 + $0x8] sm:$0xff]
  %v398 = vld [vmem:[%s5 + $0x10] sm:$0xff]
  %v399 = vld [vmem:[%s5 + $0x18] sm:$0xff]
  %v400 = vld [vmem:[%s5 + $0x20] sm:$0xff]
  %v401 = vld [vmem:[%s5 + $0x28] sm:$0xff]
  %v402 = vld [vmem:[%s5 + $0x30] sm:$0xff]
  %v403 = vld [vmem:[%s5 + $0x38] sm:$0xff]
  %v404 = vld [vmem:[%s5 + $0x40] sm:$0xff]
  %v405 = vld [vmem:[%s5 + $0x48] sm:$0xff]
  %v406 = vld [vmem:[%s5 + $0x50] sm:$0xff]
  %v407 = vld [vmem:[%s5 + $0x58] sm:$0xff]
  %v408 = vld [vmem:[%s5 + $0x60] sm:$0xff]
  %v409 = vld [vmem:[%s5 + $0x68] sm:$0xff]
  %v410 = vld [vmem:[%s5 + $0x70] sm:$0xff]
  %v411 = vld [vmem:[%s5 + $0x78] sm:$0xff]
  %v412 = vld [vmem:[%s6] sm:$0x1]
  %v414 = vperm.slane %v412, 0
  %416 = vmatpush.msra.mxu0 %v411
  %417 = vmatpush.msra.mxu0 %v410
  %418 = vmatpush.msra.mxu0 %v409
  %419 = vmatpush.msra.mxu0 %v408
  %420 = vmatpush.msra.mxu0 %v407
  %421 = vmatpush.msra.mxu0 %v406
  %422 = vmatpush.msra.mxu0 %v405
  %423 = vmatpush.msra.mxu0 %v404
  %424 = vmatpush.msra.mxu0 %v403
  %425 = vmatpush.msra.mxu0 %v402
  %426 = vmatpush.msra.mxu0 %v401
  %427 = vmatpush.msra.mxu0 %v400
  %428 = vmatpush.msra.mxu0 %v399
  %429 = vmatpush.msra.mxu0 %v398
  %430 = vmatpush.msra.mxu0 %v397
  %431 = vmatpush.msra.mxu0 %v396
  %432 = vmatmul.f32.gmra.mxu0 %v395
  %v433 = vpop.f32.mrf.mxu0
  %v434 = vadd.f32 %v414, %v433
  %435 = vdwg.mxu0
  %vm436 = vcmask 15360
  %437 = vst.msk [vmem:[%s7] sm:$0xff] %vm436, %v434
  // Predicated region
  $region30: #{fc_forward.1} parent=0 // pred_check
    _
  $region31: #{fc_forward.1} parent=0 // pred_check_branch
    %439 = sbr.rel (0) target = $region33
  $region32: #{fc_forward.1} parent=0 // pred_region
    _
  $region33: #{fc_forward.1} parent=0 // pred_fallthru
    _
  // Predicated region
  $region34: #{fc_forward.1} parent=0 // pred_check
    _
  $region35: #{fc_forward.1} parent=0 // pred_check_branch
    %441 = sbr.rel (0) target = $region37
  $region36: #{fc_forward.1} parent=0 // pred_region
    _
  $region37: #{fc_forward.1} parent=0 // pred_fallthru
    _

</llo_original>
